<compile_context>
chip_gen: v5e
topology: v5e:2x2
jax: 0.10.0
libtpu: 0.0.40
codegen_flags: <defaults>
</compile_context>

<pallas_src>
import jax
import jax.numpy as jnp
from jax.experimental import pallas as pl
from jax.experimental.pallas import tpu as pltpu


def _round_up(x, m):
    return ((x + m - 1) // m) * m


def _vmem_capacity_bytes():
    # Per-core VMEM; fall back to the most restrictive figure (v7x: 64 MiB/TC).
    try:
        return int(pltpu.get_tpu_info().vmem_capacity_bytes)
    except Exception:
        return 64 * 1024 * 1024


def _gelu_tanh(x):
    # tanh-approximate GELU; the tanh maps onto the EUP (separate issue slot).
    # TODO(synk): PyTorch nn.GELU() default is the exact erf formulation; the
    # tanh approximation differs by <~1e-3 per element.
    c = 0.7978845608028654  # sqrt(2/pi)
    return 0.5 * x * (1.0 + jnp.tanh(c * (x + 0.044715 * x * x * x)))


def _ffn_kernel_resident(x_ref, w1_ref, b1_ref, w2_ref, b2_ref, o_ref):
    # x_ref: (tm, Dp) f32    w1_ref: (Dp, Hp) bf16   b1_ref: (1, Hp) f32
    # w2_ref: (Hp, Dp) bf16  b2_ref: (1, Dp) f32     o_ref: (tm, Dp)
    h = jnp.dot(x_ref[...].astype(w1_ref.dtype), w1_ref[...],
                preferred_element_type=jnp.float32)
    h = _gelu_tanh(h + b1_ref[...])
    y = jnp.dot(h.astype(w2_ref.dtype), w2_ref[...],
                preferred_element_type=jnp.float32)
    y = y + b2_ref[...]
    # Re-read x for the residual so no f32 copy stays live across both GEMMs.
    o_ref[...] = (y + x_ref[...].astype(jnp.float32)).astype(o_ref.dtype)


def _ffn_kernel_htiled(x_ref, w1_ref, b1_ref, w2_ref, b2_ref, o_ref, acc_ref):
    # Grid = (row_tiles, h_tiles); trailing axis streams hidden tiles of W1/W2.
    h_idx = pl.program_id(1)

    @pl.when(h_idx == 0)
    def _():
        acc_ref[...] = jnp.zeros_like(acc_ref)

    h = jnp.dot(x_ref[...].astype(w1_ref.dtype), w1_ref[...],
                preferred_element_type=jnp.float32)
    h = _gelu_tanh(h + b1_ref[...])
    acc_ref[...] += jnp.dot(h.astype(w2_ref.dtype), w2_ref[...],
                            preferred_element_type=jnp.float32)

    @pl.when(h_idx == pl.num_programs(1) - 1)
    def _():
        y = acc_ref[...] + b2_ref[...]
        o_ref[...] = (y + x_ref[...].astype(jnp.float32)).astype(o_ref.dtype)


def feedforward_c(x, w1, b1, w2, b2, *, row_tile=256, mxu_dtype=jnp.bfloat16,
                  h_tile=2048, force_h_tiling=False, vmem_budget_bytes=None):
    """y = GELU(x @ w1 + b1) @ w2 + b2 + x   for x: [B, N, D]."""
    B, N, D = x.shape
    H = w1.shape[1]
    assert w1.shape == (D, H) and w2.shape == (H, D)
    assert b1.shape == (H,) and b2.shape == (D,)
    rows = B * N
    out_dtype = x.dtype
    xsize = jnp.dtype(x.dtype).itemsize
    osize = jnp.dtype(out_dtype).itemsize
    wsize = jnp.dtype(mxu_dtype).itemsize

    # Lane-dense feature padding (multiples of 128 on every block's last dim).
    Dp = _round_up(D, 128)
    Hp = _round_up(H, 128)

    # ---- Row tiling: 16-aligned, tail-waste aware, >=2 tiles for megacore. ---
    tm = max(16, _round_up(min(row_tile, _round_up(rows, 16)), 16))
    while tm > 16 and (_round_up(rows, tm) - rows) * 4 > _round_up(rows, tm):
        tm = max(16, _round_up(tm // 2, 16))          # >25% padded tail -> shrink
    if _round_up(rows, tm) // tm == 1 and tm > 16:    # give both v7x TCs work
        tm = max(16, _round_up((rows + 1) // 2, 16))
    rows_p = _round_up(rows, tm)
    grid_rows = rows_p // tm

    # ---- VMEM planning: resident weights vs. H-tiled streaming. --------------
    phys = int(vmem_budget_bytes or _vmem_capacity_bytes())
    budget = int(phys * 0.85)

    resident_need = (
        2 * tm * Dp * xsize            # x tile (double-buffered)
        + 2 * tm * Dp * osize          # out tile (double-buffered)
        + (Dp * Hp + Hp * Dp) * wsize  # W1 + W2, single-buffered (Buffered(1))
        + (Hp + Dp) * 4 * 8            # biases (f32, sublane padded)
        + tm * Hp * (4 + wsize)        # f32 hidden + bf16 copy for 2nd GEMM
        + 2 * tm * Dp * 4              # f32 y / residual temporaries
    )

    use_h_tiling = bool(force_h_tiling) or resident_need > budget

    if use_h_tiling:
        def _h_need(hh):
            return (
                2 * tm * Dp * xsize + 2 * tm * Dp * osize
                + 2 * (Dp * hh + hh * Dp) * wsize    # streamed W1/W2 tiles (x2 bufs)
                + 2 * hh * 4 * 8 + Dp * 4 * 8        # biases
                + tm * Dp * 4                        # f32 accumulator scratch
                + tm * hh * (4 + wsize)              # hidden temporaries
                + 2 * tm * Dp * 4
            )
        Hh = max(128, min(_round_up(h_tile, 128), Hp))
        while Hh > 128 and _h_need(Hh) > budget:
            Hh = max(128, _round_up(Hh // 2, 128))
        n_h = pl.cdiv(Hp, Hh)
        Hp = n_h * Hh                                # re-pad H to a tile multiple
        need = _h_need(Hh)
    else:
        Hh, n_h = Hp, 1
        need = resident_need

    vmem_limit = int(min(max(32 * 1024 * 1024, need * 5 // 4),
                         phys, 128 * 1024 * 1024))

    # ---- Host-side padding / casting (skipped when already aligned). ---------
    x2 = x.reshape(rows, D)
    if rows_p != rows or Dp != D:
        x2 = jnp.pad(x2, ((0, rows_p - rows), (0, Dp - D)))
    w1p = w1.astype(mxu_dtype)
    w2p = w2.astype(mxu_dtype)
    if Dp != D or Hp != H:
        w1p = jnp.pad(w1p, ((0, Dp - D), (0, Hp - H)))
        w2p = jnp.pad(w2p, ((0, Hp - H), (0, Dp - D)))
    b1p = b1.reshape(1, H).astype(jnp.float32)
    b2p = b2.reshape(1, D).astype(jnp.float32)
    if Hp != H:
        b1p = jnp.pad(b1p, ((0, 0), (0, Hp - H)))
    if Dp != D:
        b2p = jnp.pad(b2p, ((0, 0), (0, Dp - D)))

    # Advisory cost estimate (per-operand itemsizes; weights counted per fetch).
    weight_bytes = (Dp * Hp + Hp * Dp) * wsize * (grid_rows if use_h_tiling else 1)
    cost = pl.CostEstimate(
        flops=2 * rows_p * Dp * Hp * 2,              # two GEMMs
        transcendentals=rows_p * Hp,                 # tanh in GELU
        bytes_accessed=rows_p * Dp * (xsize + osize) + weight_bytes + (Hp + Dp) * 4,
    )

    def _call(single_buffer_weights):
        def wspec(shape, index_map):
            if single_buffer_weights:
                return pl.BlockSpec(shape, index_map, pipeline_mode=pl.Buffered(1))
            return pl.BlockSpec(shape, index_map)

        if not use_h_tiling:
            grid_spec = pltpu.PrefetchScalarGridSpec(
                num_scalar_prefetch=0,
                grid=(grid_rows,),
                in_specs=[
                    pl.BlockSpec((tm, Dp), lambda i: (i, 0)),      # x row tile
                    wspec((Dp, Hp), lambda i: (0, 0)),             # W1 (resident)
                    wspec((1, Hp), lambda i: (0, 0)),              # b1
                    wspec((Hp, Dp), lambda i: (0, 0)),             # W2 (resident)
                    wspec((1, Dp), lambda i: (0, 0)),              # b2
                ],
                out_specs=pl.BlockSpec((tm, Dp), lambda i: (i, 0)),
            )
            kernel = _ffn_kernel_resident
            semantics = ("parallel",)
        else:
            grid_spec = pltpu.PrefetchScalarGridSpec(
                num_scalar_prefetch=0,
                grid=(grid_rows, n_h),
                in_specs=[
                    pl.BlockSpec((tm, Dp), lambda i, h: (i, 0)),   # x row tile
                    pl.BlockSpec((Dp, Hh), lambda i, h: (0, h)),   # W1 hidden tile
                    pl.BlockSpec((1, Hh), lambda i, h: (0, h)),    # b1 hidden tile
                    pl.BlockSpec((Hh, Dp), lambda i, h: (h, 0)),   # W2 hidden tile
                    wspec((1, Dp), lambda i, h: (0, 0)),           # b2
                ],
                out_specs=pl.BlockSpec((tm, Dp), lambda i, h: (i, 0)),
                scratch_shapes=[pltpu.VMEM((tm, Dp), jnp.float32)],
            )
            kernel = _ffn_kernel_htiled
            semantics = ("parallel", "arbitrary")

        return pl.pallas_call(
            kernel,
            out_shape=jax.ShapeDtypeStruct((rows_p, Dp), out_dtype),
            grid_spec=grid_spec,
            compiler_params=pltpu.CompilerParams(
                dimension_semantics=semantics,
                vmem_limit_bytes=vmem_limit,
            ),
            cost_estimate=cost,
        )(x2, w1p, b1p, w2p, b2p)

    try:
        out2 = _call(single_buffer_weights=True)
    except Exception:
        # Fallback if this JAX build rejects pl.Buffered(1) single-buffering.
        out2 = _call(single_buffer_weights=False)

    if rows_p != rows or Dp != D:
        out2 = out2[:rows, :D]
    return out2.reshape(B, N, D)


if __name__ == "__main__":
    def make_inputs(B, N, D, H, key):
        kx, k1, kb1, k2, kb2 = jax.random.split(key, 5)
        x = jax.random.normal(kx, (B, N, D), dtype=jnp.float32)
        w1 = jax.random.normal(k1, (D, H), dtype=jnp.float32) * 0.05
        b1 = jax.random.normal(kb1, (H,), dtype=jnp.float32) * 0.05
        w2 = jax.random.normal(k2, (H, D), dtype=jnp.float32) * 0.05
        b2 = jax.random.normal(kb2, (D,), dtype=jnp.float32) * 0.05
        return x, w1, b1, w2, b2

    def reference(x, w1, b1, w2, b2):
        hid = jnp.einsum("bnd,dh->bnh", x, w1,
                         precision=jax.lax.Precision.HIGHEST) + b1
        hid = _gelu_tanh(hid)
        return jnp.einsum("bnh,hd->bnd", hid, w2,
                          precision=jax.lax.Precision.HIGHEST) + b2 + x

    # 1) Resident-weight path: batch=2, seq=8, dim=32, hidden=128.
    x, w1, b1, w2, b2 = make_inputs(2, 8, 32, 128, jax.random.PRNGKey(0))
    out = jax.block_until_ready(feedforward_c(x, w1, b1, w2, b2))
    ref = reference(x, w1, b1, w2, b2)
    assert out.shape == x.shape
    assert jnp.allclose(out, ref, atol=2e-2, rtol=2e-2), \
        float(jnp.max(jnp.abs(out - ref)))

    # 2) H-tiled accumulator path (forced; hidden split into two 128-wide tiles).
    x, w1, b1, w2, b2 = make_inputs(2, 24, 32, 256, jax.random.PRNGKey(1))
    out = jax.block_until_ready(
        feedforward_c(x, w1, b1, w2, b2, force_h_tiling=True, h_tile=128))
    ref = reference(x, w1, b1, w2, b2)
    assert out.shape == x.shape
    assert jnp.allclose(out, ref, atol=2e-2, rtol=2e-2), \
        float(jnp.max(jnp.abs(out - ref)))

    print("KERNEL_OK")
</pallas_src>

<mosaic_0001>
module attributes {stable_mosaic.version = 11 : i64} {
  func.func @_ffn_kernel_resident(%arg0: i32, %arg1: memref<16x128xf32, #tpu.memory_space<vmem>>, %arg2: memref<128x128xbf16, #tpu.memory_space<vmem>>, %arg3: memref<1x128xf32, #tpu.memory_space<vmem>>, %arg4: memref<128x128xbf16, #tpu.memory_space<vmem>>, %arg5: memref<1x128xf32, #tpu.memory_space<vmem>>, %arg6: memref<16x128xf32, #tpu.memory_space<vmem>>) attributes {dimension_semantics = [#tpu.dimension_semantics<parallel>], iteration_bounds = array<i64: 1>, scalar_prefetch = 0 : i64, scratch_operands = 0 : i64, tpu.core_type = #tpu.core_type<tc>, window_params = [{transform_indices = @transform_0, window_bounds = array<i64: 16, 128>}, {pipeline_mode = #tpu.pipeline_mode<synchronous>, transform_indices = @transform_1, window_bounds = array<i64: 128, 128>}, {pipeline_mode = #tpu.pipeline_mode<synchronous>, transform_indices = @transform_2, window_bounds = array<i64: 1, 128>}, {pipeline_mode = #tpu.pipeline_mode<synchronous>, transform_indices = @transform_3, window_bounds = array<i64: 128, 128>}, {pipeline_mode = #tpu.pipeline_mode<synchronous>, transform_indices = @transform_4, window_bounds = array<i64: 1, 128>}, {transform_indices = @transform_5, window_bounds = array<i64: 16, 128>}]} {
    %c0 = arith.constant 0 : index
    %c0_0 = arith.constant 0 : index
    %0 = vector.load %arg1[%c0, %c0_0] : memref<16x128xf32, #tpu.memory_space<vmem>>, vector<16x128xf32>
    %1 = arith.truncf %0 : vector<16x128xf32> to vector<16x128xbf16>
    %c0_1 = arith.constant 0 : index
    %c0_2 = arith.constant 0 : index
    %2 = vector.load %arg2[%c0_1, %c0_2] : memref<128x128xbf16, #tpu.memory_space<vmem>>, vector<128x128xbf16>
    %cst = arith.constant dense<0.000000e+00> : vector<16x128xf32>
    %3 = tpu.matmul %1, %2, %cst {dimension_numbers = #tpu.dot_dimension_numbers<[1], [0], [0], [1], [0, 0, 1, 1], [], []>} : vector<16x128xbf16>, vector<128x128xbf16>, vector<16x128xf32> -> vector<16x128xf32>
    %c0_3 = arith.constant 0 : index
    %c0_4 = arith.constant 0 : index
    %4 = vector.load %arg3[%c0_3, %c0_4] : memref<1x128xf32, #tpu.memory_space<vmem>>, vector<1x128xf32>
    %5 = vector.broadcast %4 : vector<1x128xf32> to vector<16x128xf32>
    %6 = arith.addf %3, %5 : vector<16x128xf32>
    %cst_5 = arith.constant 5.000000e-01 : f32
    %7 = vector.broadcast %cst_5 : f32 to vector<16x128xf32>
    %8 = arith.mulf %7, %6 : vector<16x128xf32>
    %cst_6 = arith.constant 4.471500e-02 : f32
    %9 = vector.broadcast %cst_6 : f32 to vector<16x128xf32>
    %10 = arith.mulf %9, %6 : vector<16x128xf32>
    %11 = arith.mulf %10, %6 : vector<16x128xf32>
    %12 = arith.mulf %11, %6 : vector<16x128xf32>
    %13 = arith.addf %6, %12 : vector<16x128xf32>
    %cst_7 = arith.constant 0.797884583 : f32
    %14 = vector.broadcast %cst_7 : f32 to vector<16x128xf32>
    %15 = arith.mulf %14, %13 : vector<16x128xf32>
    %16 = math.tanh %15 : vector<16x128xf32>
    %cst_8 = arith.constant 1.000000e+00 : f32
    %17 = vector.broadcast %cst_8 : f32 to vector<16x128xf32>
    %18 = arith.addf %17, %16 : vector<16x128xf32>
    %19 = arith.mulf %8, %18 : vector<16x128xf32>
    %20 = arith.truncf %19 : vector<16x128xf32> to vector<16x128xbf16>
    %c0_9 = arith.constant 0 : index
    %c0_10 = arith.constant 0 : index
    %21 = vector.load %arg4[%c0_9, %c0_10] : memref<128x128xbf16, #tpu.memory_space<vmem>>, vector<128x128xbf16>
    %cst_11 = arith.constant dense<0.000000e+00> : vector<16x128xf32>
    %22 = tpu.matmul %20, %21, %cst_11 {dimension_numbers = #tpu.dot_dimension_numbers<[1], [0], [0], [1], [0, 0, 1, 1], [], []>} : vector<16x128xbf16>, vector<128x128xbf16>, vector<16x128xf32> -> vector<16x128xf32>
    %c0_12 = arith.constant 0 : index
    %c0_13 = arith.constant 0 : index
    %23 = vector.load %arg5[%c0_12, %c0_13] : memref<1x128xf32, #tpu.memory_space<vmem>>, vector<1x128xf32>
    %24 = vector.broadcast %23 : vector<1x128xf32> to vector<16x128xf32>
    %25 = arith.addf %22, %24 : vector<16x128xf32>
    %c0_14 = arith.constant 0 : index
    %c0_15 = arith.constant 0 : index
    %26 = vector.load %arg1[%c0_14, %c0_15] : memref<16x128xf32, #tpu.memory_space<vmem>>, vector<16x128xf32>
    %27 = arith.addf %25, %26 : vector<16x128xf32>
    %c0_16 = arith.constant 0 : index
    %c0_17 = arith.constant 0 : index
    %28 = vector.load %arg6[%c0_16, %c0_17] : memref<16x128xf32, #tpu.memory_space<vmem>>, vector<16x128xf32>
    tpu.vector_store %arg6[%c0_16, %c0_17], %27 {strides = array<i32>} : memref<16x128xf32, #tpu.memory_space<vmem>>, vector<16x128xf32>,
    return
  }
  func.func @transform_0(%arg0: i32) -> (i32, i32) {
    %c0_i32 = arith.constant 0 : i32
    %c0_i32_0 = arith.constant 0 : i32
    return %arg0, %c0_i32 : i32, i32
  }
  func.func @transform_1(%arg0: i32) -> (i32, i32) {
    %c0_i32 = arith.constant 0 : i32
    %c0_i32_0 = arith.constant 0 : i32
    %c0_i32_1 = arith.constant 0 : i32
    return %c0_i32, %c0_i32_0 : i32, i32
  }
  func.func @transform_2(%arg0: i32) -> (i32, i32) {
    %c0_i32 = arith.constant 0 : i32
    %c0_i32_0 = arith.constant 0 : i32
    %c0_i32_1 = arith.constant 0 : i32
    return %c0_i32, %c0_i32_0 : i32, i32
  }
  func.func @transform_3(%arg0: i32) -> (i32, i32) {
    %c0_i32 = arith.constant 0 : i32
    %c0_i32_0 = arith.constant 0 : i32
    %c0_i32_1 = arith.constant 0 : i32
    return %c0_i32, %c0_i32_0 : i32, i32
  }
  func.func @transform_4(%arg0: i32) -> (i32, i32) {
    %c0_i32 = arith.constant 0 : i32
    %c0_i32_0 = arith.constant 0 : i32
    %c0_i32_1 = arith.constant 0 : i32
    return %c0_i32, %c0_i32_0 : i32, i32
  }
  func.func @transform_5(%arg0: i32) -> (i32, i32) {
    %c0_i32 = arith.constant 0 : i32
    %c0_i32_0 = arith.constant 0 : i32
    return %arg0, %c0_i32 : i32, i32
  }
}

module attributes {stable_mosaic.version = 11 : i64} {
  func.func @_ffn_kernel_resident(%arg0: i32, %arg1: memref<16x128xf32, #tpu.memory_space<vmem>>, %arg2: memref<128x128xbf16, #tpu.memory_space<vmem>>, %arg3: memref<1x128xf32, #tpu.memory_space<vmem>>, %arg4: memref<128x128xbf16, #tpu.memory_space<vmem>>, %arg5: memref<1x128xf32, #tpu.memory_space<vmem>>, %arg6: memref<16x128xf32, #tpu.memory_space<vmem>>) attributes {dimension_semantics = [#tpu.dimension_semantics<parallel>], iteration_bounds = array<i64: 1>, scalar_prefetch = 0 : i64, scratch_operands = 0 : i64, tpu.core_type = #tpu.core_type<tc>, window_params = [{transform_indices = @transform_0, window_bounds = array<i64: 16, 128>}, {pipeline_mode = #tpu.pipeline_mode<synchronous>, transform_indices = @transform_1, window_bounds = array<i64: 128, 128>}, {pipeline_mode = #tpu.pipeline_mode<synchronous>, transform_indices = @transform_2, window_bounds = array<i64: 1, 128>}, {pipeline_mode = #tpu.pipeline_mode<synchronous>, transform_indices = @transform_3, window_bounds = array<i64: 128, 128>}, {pipeline_mode = #tpu.pipeline_mode<synchronous>, transform_indices = @transform_4, window_bounds = array<i64: 1, 128>}, {transform_indices = @transform_5, window_bounds = array<i64: 16, 128>}]} {
    %c0 = arith.constant 0 : index
    %c0_0 = arith.constant 0 : index
    %0 = vector.load %arg1[%c0, %c0_0] : memref<16x128xf32, #tpu.memory_space<vmem>>, vector<16x128xf32>
    %1 = arith.truncf %0 : vector<16x128xf32> to vector<16x128xbf16>
    %c0_1 = arith.constant 0 : index
    %c0_2 = arith.constant 0 : index
    %2 = vector.load %arg2[%c0_1, %c0_2] : memref<128x128xbf16, #tpu.memory_space<vmem>>, vector<128x128xbf16>
    %cst = arith.constant dense<0.000000e+00> : vector<16x128xf32>
    %3 = tpu.matmul %1, %2, %cst {dimension_numbers = #tpu.dot_dimension_numbers<[1], [0], [0], [1], [0, 0, 1, 1], [], []>} : vector<16x128xbf16>, vector<128x128xbf16>, vector<16x128xf32> -> vector<16x128xf32>
    %c0_3 = arith.constant 0 : index
    %c0_4 = arith.constant 0 : index
    %4 = vector.load %arg3[%c0_3, %c0_4] : memref<1x128xf32, #tpu.memory_space<vmem>>, vector<1x128xf32>
    %5 = vector.broadcast %4 : vector<1x128xf32> to vector<16x128xf32>
    %6 = arith.addf %3, %5 : vector<16x128xf32>
    %cst_5 = arith.constant 5.000000e-01 : f32
    %7 = vector.broadcast %cst_5 : f32 to vector<16x128xf32>
    %8 = arith.mulf %7, %6 : vector<16x128xf32>
    %cst_6 = arith.constant 4.471500e-02 : f32
    %9 = vector.broadcast %cst_6 : f32 to vector<16x128xf32>
    %10 = arith.mulf %9, %6 : vector<16x128xf32>
    %11 = arith.mulf %10, %6 : vector<16x128xf32>
    %12 = arith.mulf %11, %6 : vector<16x128xf32>
    %13 = arith.addf %6, %12 : vector<16x128xf32>
    %cst_7 = arith.constant 0.797884583 : f32
    %14 = vector.broadcast %cst_7 : f32 to vector<16x128xf32>
    %15 = arith.mulf %14, %13 : vector<16x128xf32>
    %16 = math.tanh %15 : vector<16x128xf32>
    %cst_8 = arith.constant 1.000000e+00 : f32
    %17 = vector.broadcast %cst_8 : f32 to vector<16x128xf32>
    %18 = arith.addf %17, %16 : vector<16x128xf32>
    %19 = arith.mulf %8, %18 : vector<16x128xf32>
    %20 = arith.truncf %19 : vector<16x128xf32> to vector<16x128xbf16>
    %c0_9 = arith.constant 0 : index
    %c0_10 = arith.constant 0 : index
    %21 = vector.load %arg4[%c0_9, %c0_10] : memref<128x128xbf16, #tpu.memory_space<vmem>>, vector<128x128xbf16>
    %cst_11 = arith.constant dense<0.000000e+00> : vector<16x128xf32>
    %22 = tpu.matmul %20, %21, %cst_11 {dimension_numbers = #tpu.dot_dimension_numbers<[1], [0], [0], [1], [0, 0, 1, 1], [], []>} : vector<16x128xbf16>, vector<128x128xbf16>, vector<16x128xf32> -> vector<16x128xf32>
    %c0_12 = arith.constant 0 : index
    %c0_13 = arith.constant 0 : index
    %23 = vector.load %arg5[%c0_12, %c0_13] : memref<1x128xf32, #tpu.memory_space<vmem>>, vector<1x128xf32>
    %24 = vector.broadcast %23 : vector<1x128xf32> to vector<16x128xf32>
    %25 = arith.addf %22, %24 : vector<16x128xf32>
    %c0_14 = arith.constant 0 : index
    %c0_15 = arith.constant 0 : index
    %26 = vector.load %arg1[%c0_14, %c0_15] : memref<16x128xf32, #tpu.memory_space<vmem>>, vector<16x128xf32>
    %27 = arith.addf %25, %26 : vector<16x128xf32>
    %c0_16 = arith.constant 0 : index
    %c0_17 = arith.constant 0 : index
    %28 = vector.load %arg6[%c0_16, %c0_17] : memref<16x128xf32, #tpu.memory_space<vmem>>, vector<16x128xf32>
    tpu.vector_store %arg6[%c0_16, %c0_17], %27 {strides = array<i32>} : memref<16x128xf32, #tpu.memory_space<vmem>>, vector<16x128xf32>,
    return
  }
  func.func @transform_0(%arg0: i32) -> (i32, i32) {
    %c0_i32 = arith.constant 0 : i32
    %c0_i32_0 = arith.constant 0 : i32
    return %arg0, %c0_i32 : i32, i32
  }
  func.func @transform_1(%arg0: i32) -> (i32, i32) {
    %c0_i32 = arith.constant 0 : i32
    %c0_i32_0 = arith.constant 0 : i32
    %c0_i32_1 = arith.constant 0 : i32
    return %c0_i32, %c0_i32_0 : i32, i32
  }
  func.func @transform_2(%arg0: i32) -> (i32, i32) {
    %c0_i32 = arith.constant 0 : i32
    %c0_i32_0 = arith.constant 0 : i32
    %c0_i32_1 = arith.constant 0 : i32
    return %c0_i32, %c0_i32_0 : i32, i32
  }
  func.func @transform_3(%arg0: i32) -> (i32, i32) {
    %c0_i32 = arith.constant 0 : i32
    %c0_i32_0 = arith.constant 0 : i32
    %c0_i32_1 = arith.constant 0 : i32
    return %c0_i32, %c0_i32_0 : i32, i32
  }
  func.func @transform_4(%arg0: i32) -> (i32, i32) {
    %c0_i32 = arith.constant 0 : i32
    %c0_i32_0 = arith.constant 0 : i32
    %c0_i32_1 = arith.constant 0 : i32
    return %c0_i32, %c0_i32_0 : i32, i32
  }
  func.func @transform_5(%arg0: i32) -> (i32, i32) {
    %c0_i32 = arith.constant 0 : i32
    %c0_i32_0 = arith.constant 0 : i32
    return %arg0, %c0_i32 : i32, i32
  }
}

</mosaic_0001>

<llo_original>
// kernel: tpu_custom_call.1
$region0: #{tpu_custom_call.1}
  #allocation0 [shape = 'u32[]', space=smem, size = 0x4, offset = 0x4, fixed_abs, tag = 'smem constant byte address 0x4 - core index']
  #allocation1 [shape = 'u32[72,128]{1,0:T(1,128)}', space=vmem, size = 0x9000, scoped, tag = 'internal scratch']
  %s0 = inlined_call_operand.hbm [shape: f32[16,128], index: 0, kind: input, shape index: {}]
  %s1 = inlined_call_operand.hbm [shape: bf16[128,128], index: 1, kind: input, shape index: {}]
  %s2 = inlined_call_operand.vmem [shape: f32[1,128], index: 2, kind: input, shape index: {}]
  %s3 = inlined_call_operand.hbm [shape: bf16[128,128], index: 3, kind: input, shape index: {}]
  %s4 = inlined_call_operand.vmem [shape: f32[1,128], index: 4, kind: input, shape index: {}]
  %s5 = inlined_call_operand.hbm [shape: f32[16,128], index: 5, kind: output, shape index: {}]
  %s6 = sld [smem:[#allocation0]]
  $region42: #{tpu_custom_call.1} parent=0
    _
  %s8 = ssub.s32 1, %s6
  %s9 = scalar_select 0, %s8, %s6
  $region1: #{tpu_custom_call.1} parent=0
    #allocation2 [shape = 'u8[8192]{0}', space=vmem, size = 0x2000, scoped, tag = 'input window, operand 0, single buffered']
    #allocation3 [shape = 's32[1]{0}', space=sflag, size = 0x4, scoped, tag = 'scoped memory for tpu_custom_call.1']
    #allocation4 [shape = 's32[1]{0}', space=sflag, size = 0x4, scoped, tag = 'scoped memory for tpu_custom_call.1']
    #allocation5 [shape = 'u8[32768]{0}', space=vmem, size = 0x8000, scoped, tag = 'input window, operand 1, single buffered']
    #allocation6 [shape = 's32[1]{0}', space=sflag, size = 0x4, scoped, tag = 'scoped memory for tpu_custom_call.1']
    #allocation7 [shape = 'u8[32768]{0}', space=vmem, size = 0x8000, scoped, tag = 'input window, operand 3, single buffered']
    #allocation8 [shape = 'u8[8192]{0}', space=vmem, size = 0x2000, scoped, tag = 'output window, operand 0, single buffered']
    %10 = vsyncpa [#allocation3], 0
    %11 = vsyncpa [#allocation6], 0
    %12 = vsyncpa [#allocation4], 0
    // Predicated region
    $region2: #{tpu_custom_call.1} parent=1 // pred_check
      _
    $region3: #{tpu_custom_call.1} parent=1 // pred_check_branch
      %14 = sbr.rel (0) target = $region5
    $region4: #{tpu_custom_call.1} parent=1 // pred_region
      %16 = vsyncadd [#allocation3], 0
      %s17 = sshll.u32 %s0, 4
      %s18 = int_to_ptr.hbm [resolvable:$true] %s17
      %s19 = sshll.u32 [#allocation2], 4
      %s20 = int_to_ptr.vmem [resolvable:$true] %s19
      %25 = dma.hbm_to_vmem [thread:$0]  %s18, 256, %s20, [#allocation3], 128, 128, 8
    $region5: #{tpu_custom_call.1} parent=1 // pred_fallthru
      _
    // Predicated region
    $region6: #{tpu_custom_call.1} parent=1 // pred_check
      _
    $region7: #{tpu_custom_call.1} parent=1 // pred_check_branch
      %27 = sbr.rel (0) target = $region9
    $region8: #{tpu_custom_call.1} parent=1 // pred_region
      %29 = vsyncadd [#allocation6], 0
      %s30 = sshll.u32 %s1, 4
      %s31 = int_to_ptr.hbm [resolvable:$true] %s30
      %s32 = sshll.u32 [#allocation5], 4
      %s33 = int_to_ptr.vmem [resolvable:$true] %s32
      %38 = dma.hbm_to_vmem [thread:$0]  %s31, 1024, %s33, [#allocation6], 64, 64, 4
    $region9: #{tpu_custom_call.1} parent=1 // pred_fallthru
      _
    // Predicated region
    $region10: #{tpu_custom_call.1} parent=1 // pred_check
      _
    $region11: #{tpu_custom_call.1} parent=1 // pred_check_branch
      %40 = sbr.rel (0) target = $region13
    $region12: #{tpu_custom_call.1} parent=1 // pred_region
      _
    $region13: #{tpu_custom_call.1} parent=1 // pred_fallthru
      _
    // Predicated region
    $region14: #{tpu_custom_call.1} parent=1 // pred_check
      _
    $region15: #{tpu_custom_call.1} parent=1 // pred_check_branch
      %42 = sbr.rel (0) target = $region17
    $region16: #{tpu_custom_call.1} parent=1 // pred_region
      %44 = vsyncadd [#allocation6], 0
      %s45 = sshll.u32 %s3, 4
      %s46 = int_to_ptr.hbm [resolvable:$true] %s45
      %s47 = sshll.u32 [#allocation7], 4
      %s48 = int_to_ptr.vmem [resolvable:$true] %s47
      %53 = dma.hbm_to_vmem [thread:$0]  %s46, 1024, %s48, [#allocation6], 64, 64, 4
    $region17: #{tpu_custom_call.1} parent=1 // pred_fallthru
      _
    // Predicated region
    $region18: #{tpu_custom_call.1} parent=1 // pred_check
      _
    $region19: #{tpu_custom_call.1} parent=1 // pred_check_branch
      %55 = sbr.rel (0) target = $region21
    $region20: #{tpu_custom_call.1} parent=1 // pred_region
      _
    $region21: #{tpu_custom_call.1} parent=1 // pred_fallthru
      _
    // Predicated region
    $region22: #{tpu_custom_call.1} parent=1 // pred_check
      _
    $region23: #{tpu_custom_call.1} parent=1 // pred_check_branch
      %57 = sbr.rel (0) target = $region25
    $region24: #{tpu_custom_call.1} parent=1 // pred_region
      %59 = dma.done [#allocation3], 256
    $region25: #{tpu_custom_call.1} parent=1 // pred_fallthru
      _
    // Predicated region
    $region26: #{tpu_custom_call.1} parent=1 // pred_check
      _
    $region27: #{tpu_custom_call.1} parent=1 // pred_check_branch
      %61 = sbr.rel (0) target = $region29
    $region28: #{tpu_custom_call.1} parent=1 // pred_region
      %63 = dma.done [#allocation6], 1024
    $region29: #{tpu_custom_call.1} parent=1 // pred_fallthru
      _
    // Predicated region
    $region30: #{tpu_custom_call.1} parent=1 // pred_check
      _
    $region31: #{tpu_custom_call.1} parent=1 // pred_check_branch
      %65 = sbr.rel (0) target = $region33
    $region32: #{tpu_custom_call.1} parent=1 // pred_region
      %67 = dma.done [#allocation6], 1024
    $region33: #{tpu_custom_call.1} parent=1 // pred_fallthru
      _
    %v68 = vld [vmem:[#allocation2] sm:$0xff]
    %v69 = vld [vmem:[#allocation2 + $0x8] sm:$0xff]
    %v70 = vpack.c.bf16 %v69, %v68
    %v71 = vld [vmem:[#allocation5] sm:$0xf]
    %v72 = vld [vmem:[#allocation5 + $0x4] sm:$0xf]
    %v73 = vld [vmem:[#allocation5 + $0x8] sm:$0xf]
    %v74 = vld [vmem:[#allocation5 + $0xc] sm:$0xf]
    %v75 = vld [vmem:[#allocation5 + $0x10] sm:$0xf]
    %v76 = vld [vmem:[#allocation5 + $0x14] sm:$0xf]
    %v77 = vld [vmem:[#allocation5 + $0x18] sm:$0xf]
    %v78 = vld [vmem:[#allocation5 + $0x1c] sm:$0xf]
    %v79 = vld [vmem:[#allocation5 + $0x20] sm:$0xf]
    %v80 = vld [vmem:[#allocation5 + $0x24] sm:$0xf]
    %v81 = vld [vmem:[#allocation5 + $0x28] sm:$0xf]
    %v82 = vld [vmem:[#allocation5 + $0x2c] sm:$0xf]
    %v83 = vld [vmem:[#allocation5 + $0x30] sm:$0xf]
    %v84 = vld [vmem:[#allocation5 + $0x34] sm:$0xf]
    %v85 = vld [vmem:[#allocation5 + $0x38] sm:$0xf]
    %v86 = vld [vmem:[#allocation5 + $0x3c] sm:$0xf]
    %v87 = vld [vmem:[%s2] sm:$0x1]
    %v89 = vperm.slane %v87, 0
    %v107 = vunpack.c.l.b16 %v71
    %v108 = vunpack.c.l.b16 %v72
    %v109 = vunpack.c.l.b16 %v73
    %v110 = vunpack.c.l.b16 %v74
    %v111 = vunpack.c.l.b16 %v75
    %v112 = vunpack.c.l.b16 %v76
    %v113 = vunpack.c.l.b16 %v77
    %v114 = vunpack.c.l.b16 %v78
    %v115 = vunpack.c.l.b16 %v79
    %v116 = vunpack.c.l.b16 %v80
    %v117 = vunpack.c.l.b16 %v81
    %v118 = vunpack.c.l.b16 %v82
    %v119 = vunpack.c.l.b16 %v83
    %v120 = vunpack.c.l.b16 %v84
    %v121 = vunpack.c.l.b16 %v85
    %v122 = vunpack.c.l.b16 %v86
    %v123 = vpack.c.b16 %v108, %v107
    %v124 = vpack.c.b16 %v110, %v109
    %v125 = vpack.c.b16 %v112, %v111
    %v126 = vpack.c.b16 %v114, %v113
    %v127 = vpack.c.b16 %v116, %v115
    %v128 = vpack.c.b16 %v118, %v117
    %v129 = vpack.c.b16 %v120, %v119
    %v130 = vpack.c.b16 %v122, %v121
    %139 = vmatpush.bf16.msra.mxu0 %v130
    %140 = vmatpush.bf16.msra.mxu0 %v129
    %141 = vmatpush.bf16.msra.mxu0 %v128
    %142 = vmatpush.bf16.msra.mxu0 %v127
    %143 = vmatpush.bf16.msra.mxu0 %v126
    %144 = vmatpush.bf16.msra.mxu0 %v125
    %145 = vmatpush.bf16.msra.mxu0 %v124
    %146 = vmatpush.bf16.msra.mxu0 %v123
    %147 = vmatmul.bf16.gmra.mxu0 %v70
    %v148 = vpop.f32.mrf.mxu0
    %v149 = vadd.f32 %v89, %v148
    %v150 = vpop.f32.mrf.mxu0
    %v151 = vadd.f32 %v89, %v150
    %152 = vdwg.mxu0
    %v153 = vmul.f32 %v149, 0.5
    %v154 = vmul.f32 %v151, 0.5
    %v155 = vmul.f32 %v149, 0.044715
    %v156 = vmul.f32 %v151, 0.044715
    %v157 = vmul.f32 %v155, %v149
    %v158 = vmul.f32 %v156, %v151
    %v159 = vmul.f32 %v157, %v149
    %v160 = vmul.f32 %v158, %v151
    %v161 = vadd.f32 %v149, %v159
    %v162 = vadd.f32 %v151, %v160
    %v163 = vmul.f32 %v161, 0.7978846
    %v164 = vmul.f32 %v162, 0.7978846
    %v165 = vtanh.pop %v163
    %v166 = vtanh.pop %v164
    %v167 = vadd.f32 %v165, 1.0
    %v168 = vadd.f32 %v166, 1.0
    %v169 = vmul.f32 %v153, %v167
    %v170 = vmul.f32 %v154, %v168
    %v171 = vpack.c.bf16 %v170, %v169
    %v172 = vld [vmem:[#allocation7] sm:$0xf]
    %v173 = vld [vmem:[#allocation7 + $0x4] sm:$0xf]
    %v174 = vld [vmem:[#allocation7 + $0x8] sm:$0xf]
    %v175 = vld [vmem:[#allocation7 + $0xc] sm:$0xf]
    %v176 = vld [vmem:[#allocation7 + $0x10] sm:$0xf]
    %v177 = vld [vmem:[#allocation7 + $0x14] sm:$0xf]
    %v178 = vld [vmem:[#allocation7 + $0x18] sm:$0xf]
    %v179 = vld [vmem:[#allocation7 + $0x1c] sm:$0xf]
    %v180 = vld [vmem:[#allocation7 + $0x20] sm:$0xf]
    %v181 = vld [vmem:[#allocation7 + $0x24] sm:$0xf]
    %v182 = vld [vmem:[#allocation7 + $0x28] sm:$0xf]
    %v183 = vld [vmem:[#allocation7 + $0x2c] sm:$0xf]
    %v184 = vld [vmem:[#allocation7 + $0x30] sm:$0xf]
    %v185 = vld [vmem:[#allocation7 + $0x34] sm:$0xf]
    %v186 = vld [vmem:[#allocation7 + $0x38] sm:$0xf]
    %v187 = vld [vmem:[#allocation7 + $0x3c] sm:$0xf]
    %v188 = vld [vmem:[%s4] sm:$0x1]
    %v190 = vperm.slane %v188, 0
    %v208 = vunpack.c.l.b16 %v172
    %v209 = vunpack.c.l.b16 %v173
    %v210 = vunpack.c.l.b16 %v174
    %v211 = vunpack.c.l.b16 %v175
    %v212 = vunpack.c.l.b16 %v176
    %v213 = vunpack.c.l.b16 %v177
    %v214 = vunpack.c.l.b16 %v178
    %v215 = vunpack.c.l.b16 %v179
    %v216 = vunpack.c.l.b16 %v180
    %v217 = vunpack.c.l.b16 %v181
    %v218 = vunpack.c.l.b16 %v182
    %v219 = vunpack.c.l.b16 %v183
    %v220 = vunpack.c.l.b16 %v184
    %v221 = vunpack.c.l.b16 %v185
    %v222 = vunpack.c.l.b16 %v186
    %v223 = vunpack.c.l.b16 %v187
    %v224 = vpack.c.b16 %v209, %v208
    %v225 = vpack.c.b16 %v211, %v210
    %v226 = vpack.c.b16 %v213, %v212
    %v227 = vpack.c.b16 %v215, %v214
    %v228 = vpack.c.b16 %v217, %v216
    %v229 = vpack.c.b16 %v219, %v218
    %v230 = vpack.c.b16 %v221, %v220
    %v231 = vpack.c.b16 %v223, %v222
    %240 = vmatpush.bf16.msra.mxu0 %v231
    %241 = vmatpush.bf16.msra.mxu0 %v230
    %242 = vmatpush.bf16.msra.mxu0 %v229
    %243 = vmatpush.bf16.msra.mxu0 %v228
    %244 = vmatpush.bf16.msra.mxu0 %v227
    %245 = vmatpush.bf16.msra.mxu0 %v226
    %246 = vmatpush.bf16.msra.mxu0 %v225
    %247 = vmatpush.bf16.msra.mxu0 %v224
    %248 = vmatmul.bf16.gmra.mxu0 %v171
    %v249 = vpop.f32.mrf.mxu0
    %v250 = vadd.f32 %v190, %v249
    %v251 = vpop.f32.mrf.mxu0
    %v252 = vadd.f32 %v190, %v251
    %253 = vdwg.mxu0
    %v254 = vadd.f32 %v250, %v68
    %v255 = vadd.f32 %v252, %v69
    %256 = vst [vmem:[#allocation8] sm:$0xff] %v254
    %257 = vst [vmem:[#allocation8 + $0x8] sm:$0xff] %v255
    // Predicated region
    $region34: #{tpu_custom_call.1} parent=1 // pred_check
      _
    $region35: #{tpu_custom_call.1} parent=1 // pred_check_branch
      %259 = sbr.rel (0) target = $region37
    $region36: #{tpu_custom_call.1} parent=1 // pred_region
      %261 = vsyncadd [#allocation4], 0
      %s262 = sshll.u32 [#allocation8], 4
      %s263 = int_to_ptr.vmem [resolvable:$true] %s262
      %s264 = sshll.u32 %s5, 4
      %s265 = int_to_ptr.hbm [resolvable:$true] %s264
      %270 = dma.vmem_to_hbm [thread:$0]  %s263, 256, %s265, [#allocation4], 128, 128, 8
    $region37: #{tpu_custom_call.1} parent=1 // pred_fallthru
      _
    // Predicated region
    $region38: #{tpu_custom_call.1} parent=1 // pred_check
      _
    $region39: #{tpu_custom_call.1} parent=1 // pred_check_branch
      %272 = sbr.rel (0) target = $region41
    $region40: #{tpu_custom_call.1} parent=1 // pred_region
      %274 = dma.done [#allocation4], 256
    $region41: #{tpu_custom_call.1} parent=1 // pred_fallthru
      _
    %275 = vsyncpa [#allocation3], 1
    %276 = vsyncpa [#allocation6], 1
    %277 = vsyncpa [#allocation4], 1

// kernel: tpu_custom_call.1
$region0: #{tpu_custom_call.1}
  #allocation0 [shape = 'u32[]', space=smem, size = 0x4, offset = 0x4, fixed_abs, tag = 'smem constant byte address 0x4 - core index']
  #allocation1 [shape = 'u32[72,128]{1,0:T(1,128)}', space=vmem, size = 0x9000, scoped, tag = 'internal scratch']
  %s0 = inlined_call_operand.hbm [shape: f32[16,128], index: 0, kind: input, shape index: {}]
  %s1 = inlined_call_operand.hbm [shape: bf16[128,128], index: 1, kind: input, shape index: {}]
  %s2 = inlined_call_operand.vmem [shape: f32[1,128], index: 2, kind: input, shape index: {}]
  %s3 = inlined_call_operand.hbm [shape: bf16[128,128], index: 3, kind: input, shape index: {}]
  %s4 = inlined_call_operand.vmem [shape: f32[1,128], index: 4, kind: input, shape index: {}]
  %s5 = inlined_call_operand.hbm [shape: f32[16,128], index: 5, kind: output, shape index: {}]
  %s6 = sld [smem:[#allocation0]]
  $region42: #{tpu_custom_call.1} parent=0
    _
  %s8 = ssub.s32 1, %s6
  %s9 = scalar_select 0, %s8, %s6
  $region1: #{tpu_custom_call.1} parent=0
    #allocation2 [shape = 'u8[8192]{0}', space=vmem, size = 0x2000, scoped, tag = 'input window, operand 0, single buffered']
    #allocation3 [shape = 's32[1]{0}', space=sflag, size = 0x4, scoped, tag = 'scoped memory for tpu_custom_call.1']
    #allocation4 [shape = 's32[1]{0}', space=sflag, size = 0x4, scoped, tag = 'scoped memory for tpu_custom_call.1']
    #allocation5 [shape = 'u8[32768]{0}', space=vmem, size = 0x8000, scoped, tag = 'input window, operand 1, single buffered']
    #allocation6 [shape = 's32[1]{0}', space=sflag, size = 0x4, scoped, tag = 'scoped memory for tpu_custom_call.1']
    #allocation7 [shape = 'u8[32768]{0}', space=vmem, size = 0x8000, scoped, tag = 'input window, operand 3, single buffered']
    #allocation8 [shape = 'u8[8192]{0}', space=vmem, size = 0x2000, scoped, tag = 'output window, operand 0, single buffered']
    %10 = vsyncpa [#allocation3], 0
    %11 = vsyncpa [#allocation6], 0
    %12 = vsyncpa [#allocation4], 0
    // Predicated region
    $region2: #{tpu_custom_call.1} parent=1 // pred_check
      _
    $region3: #{tpu_custom_call.1} parent=1 // pred_check_branch
      %14 = sbr.rel (0) target = $region5
    $region4: #{tpu_custom_call.1} parent=1 // pred_region
      %16 = vsyncadd [#allocation3], 0
      %s17 = sshll.u32 %s0, 4
      %s18 = int_to_ptr.hbm [resolvable:$true] %s17
      %s19 = sshll.u32 [#allocation2], 4
      %s20 = int_to_ptr.vmem [resolvable:$true] %s19
      %25 = dma.hbm_to_vmem [thread:$0]  %s18, 256, %s20, [#allocation3], 128, 128, 8
    $region5: #{tpu_custom_call.1} parent=1 // pred_fallthru
      _
    // Predicated region
    $region6: #{tpu_custom_call.1} parent=1 // pred_check
      _
    $region7: #{tpu_custom_call.1} parent=1 // pred_check_branch
      %27 = sbr.rel (0) target = $region9
    $region8: #{tpu_custom_call.1} parent=1 // pred_region
      %29 = vsyncadd [#allocation6], 0
      %s30 = sshll.u32 %s1, 4
      %s31 = int_to_ptr.hbm [resolvable:$true] %s30
      %s32 = sshll.u32 [#allocation5], 4
      %s33 = int_to_ptr.vmem [resolvable:$true] %s32
      %38 = dma.hbm_to_vmem [thread:$0]  %s31, 1024, %s33, [#allocation6], 64, 64, 4
    $region9: #{tpu_custom_call.1} parent=1 // pred_fallthru
      _
    // Predicated region
    $region10: #{tpu_custom_call.1} parent=1 // pred_check
      _
    $region11: #{tpu_custom_call.1} parent=1 // pred_check_branch
      %40 = sbr.rel (0) target = $region13
    $region12: #{tpu_custom_call.1} parent=1 // pred_region
      _
    $region13: #{tpu_custom_call.1} parent=1 // pred_fallthru
      _
    // Predicated region
    $region14: #{tpu_custom_call.1} parent=1 // pred_check
      _
    $region15: #{tpu_custom_call.1} parent=1 // pred_check_branch
      %42 = sbr.rel (0) target = $region17
    $region16: #{tpu_custom_call.1} parent=1 // pred_region
      %44 = vsyncadd [#allocation6], 0
      %s45 = sshll.u32 %s3, 4
      %s46 = int_to_ptr.hbm [resolvable:$true] %s45
      %s47 = sshll.u32 [#allocation7], 4
      %s48 = int_to_ptr.vmem [resolvable:$true] %s47
      %53 = dma.hbm_to_vmem [thread:$0]  %s46, 1024, %s48, [#allocation6], 64, 64, 4
    $region17: #{tpu_custom_call.1} parent=1 // pred_fallthru
      _
    // Predicated region
    $region18: #{tpu_custom_call.1} parent=1 // pred_check
      _
    $region19: #{tpu_custom_call.1} parent=1 // pred_check_branch
      %55 = sbr.rel (0) target = $region21
    $region20: #{tpu_custom_call.1} parent=1 // pred_region
      _
    $region21: #{tpu_custom_call.1} parent=1 // pred_fallthru
      _
    // Predicated region
    $region22: #{tpu_custom_call.1} parent=1 // pred_check
      _
    $region23: #{tpu_custom_call.1} parent=1 // pred_check_branch
      %57 = sbr.rel (0) target = $region25
    $region24: #{tpu_custom_call.1} parent=1 // pred_region
      %59 = dma.done [#allocation3], 256
    $region25: #{tpu_custom_call.1} parent=1 // pred_fallthru
      _
    // Predicated region
    $region26: #{tpu_custom_call.1} parent=1 // pred_check
      _
    $region27: #{tpu_custom_call.1} parent=1 // pred_check_branch
      %61 = sbr.rel (0) target = $region29
    $region28: #{tpu_custom_call.1} parent=1 // pred_region
      %63 = dma.done [#allocation6], 1024
    $region29: #{tpu_custom_call.1} parent=1 // pred_fallthru
      _
    // Predicated region
    $region30: #{tpu_custom_call.1} parent=1 // pred_check
      _
    $region31: #{tpu_custom_call.1} parent=1 // pred_check_branch
      %65 = sbr.rel (0) target = $region33
    $region32: #{tpu_custom_call.1} parent=1 // pred_region
      %67 = dma.done [#allocation6], 1024
    $region33: #{tpu_custom_call.1} parent=1 // pred_fallthru
      _
    %v68 = vld [vmem:[#allocation2] sm:$0xff]
    %v69 = vld [vmem:[#allocation2 + $0x8] sm:$0xff]
    %v70 = vpack.c.bf16 %v69, %v68
    %v71 = vld [vmem:[#allocation5] sm:$0xf]
    %v72 = vld [vmem:[#allocation5 + $0x4] sm:$0xf]
    %v73 = vld [vmem:[#allocation5 + $0x8] sm:$0xf]
    %v74 = vld [vmem:[#allocation5 + $0xc] sm:$0xf]
    %v75 = vld [vmem:[#allocation5 + $0x10] sm:$0xf]
    %v76 = vld [vmem:[#allocation5 + $0x14] sm:$0xf]
    %v77 = vld [vmem:[#allocation5 + $0x18] sm:$0xf]
    %v78 = vld [vmem:[#allocation5 + $0x1c] sm:$0xf]
    %v79 = vld [vmem:[#allocation5 + $0x20] sm:$0xf]
    %v80 = vld [vmem:[#allocation5 + $0x24] sm:$0xf]
    %v81 = vld [vmem:[#allocation5 + $0x28] sm:$0xf]
    %v82 = vld [vmem:[#allocation5 + $0x2c] sm:$0xf]
    %v83 = vld [vmem:[#allocation5 + $0x30] sm:$0xf]
    %v84 = vld [vmem:[#allocation5 + $0x34] sm:$0xf]
    %v85 = vld [vmem:[#allocation5 + $0x38] sm:$0xf]
    %v86 = vld [vmem:[#allocation5 + $0x3c] sm:$0xf]
    %v87 = vld [vmem:[%s2] sm:$0x1]
    %v89 = vperm.slane %v87, 0
    %v107 = vunpack.c.l.b16 %v71
    %v108 = vunpack.c.l.b16 %v72
    %v109 = vunpack.c.l.b16 %v73
    %v110 = vunpack.c.l.b16 %v74
    %v111 = vunpack.c.l.b16 %v75
    %v112 = vunpack.c.l.b16 %v76
    %v113 = vunpack.c.l.b16 %v77
    %v114 = vunpack.c.l.b16 %v78
    %v115 = vunpack.c.l.b16 %v79
    %v116 = vunpack.c.l.b16 %v80
    %v117 = vunpack.c.l.b16 %v81
    %v118 = vunpack.c.l.b16 %v82
    %v119 = vunpack.c.l.b16 %v83
    %v120 = vunpack.c.l.b16 %v84
    %v121 = vunpack.c.l.b16 %v85
    %v122 = vunpack.c.l.b16 %v86
    %v123 = vpack.c.b16 %v108, %v107
    %v124 = vpack.c.b16 %v110, %v109
    %v125 = vpack.c.b16 %v112, %v111
    %v126 = vpack.c.b16 %v114, %v113
    %v127 = vpack.c.b16 %v116, %v115
    %v128 = vpack.c.b16 %v118, %v117
    %v129 = vpack.c.b16 %v120, %v119
    %v130 = vpack.c.b16 %v122, %v121
    %139 = vmatpush.bf16.msra.mxu0 %v130
    %140 = vmatpush.bf16.msra.mxu0 %v129
    %141 = vmatpush.bf16.msra.mxu0 %v128
    %142 = vmatpush.bf16.msra.mxu0 %v127
    %143 = vmatpush.bf16.msra.mxu0 %v126
    %144 = vmatpush.bf16.msra.mxu0 %v125
    %145 = vmatpush.bf16.msra.mxu0 %v124
    %146 = vmatpush.bf16.msra.mxu0 %v123
    %147 = vmatmul.bf16.gmra.mxu0 %v70
    %v148 = vpop.f32.mrf.mxu0
    %v149 = vadd.f32 %v89, %v148
    %v150 = vpop.f32.mrf.mxu0
    %v151 = vadd.f32 %v89, %v150
    %152 = vdwg.mxu0
    %v153 = vmul.f32 %v149, 0.5
    %v154 = vmul.f32 %v151, 0.5
    %v155 = vmul.f32 %v149, 0.044715
    %v156 = vmul.f32 %v151, 0.044715
    %v157 = vmul.f32 %v155, %v149
    %v158 = vmul.f32 %v156, %v151
    %v159 = vmul.f32 %v157, %v149
    %v160 = vmul.f32 %v158, %v151
    %v161 = vadd.f32 %v149, %v159
    %v162 = vadd.f32 %v151, %v160
    %v163 = vmul.f32 %v161, 0.7978846
    %v164 = vmul.f32 %v162, 0.7978846
    %v165 = vtanh.pop %v163
    %v166 = vtanh.pop %v164
    %v167 = vadd.f32 %v165, 1.0
    %v168 = vadd.f32 %v166, 1.0
    %v169 = vmul.f32 %v153, %v167
    %v170 = vmul.f32 %v154, %v168
    %v171 = vpack.c.bf16 %v170, %v169
    %v172 = vld [vmem:[#allocation7] sm:$0xf]
    %v173 = vld [vmem:[#allocation7 + $0x4] sm:$0xf]
    %v174 = vld [vmem:[#allocation7 + $0x8] sm:$0xf]
    %v175 = vld [vmem:[#allocation7 + $0xc] sm:$0xf]
    %v176 = vld [vmem:[#allocation7 + $0x10] sm:$0xf]
    %v177 = vld [vmem:[#allocation7 + $0x14] sm:$0xf]
    %v178 = vld [vmem:[#allocation7 + $0x18] sm:$0xf]
    %v179 = vld [vmem:[#allocation7 + $0x1c] sm:$0xf]
    %v180 = vld [vmem:[#allocation7 + $0x20] sm:$0xf]
    %v181 = vld [vmem:[#allocation7 + $0x24] sm:$0xf]
    %v182 = vld [vmem:[#allocation7 + $0x28] sm:$0xf]
    %v183 = vld [vmem:[#allocation7 + $0x2c] sm:$0xf]
    %v184 = vld [vmem:[#allocation7 + $0x30] sm:$0xf]
    %v185 = vld [vmem:[#allocation7 + $0x34] sm:$0xf]
    %v186 = vld [vmem:[#allocation7 + $0x38] sm:$0xf]
    %v187 = vld [vmem:[#allocation7 + $0x3c] sm:$0xf]
    %v188 = vld [vmem:[%s4] sm:$0x1]
    %v190 = vperm.slane %v188, 0
    %v208 = vunpack.c.l.b16 %v172
    %v209 = vunpack.c.l.b16 %v173
    %v210 = vunpack.c.l.b16 %v174
    %v211 = vunpack.c.l.b16 %v175
    %v212 = vunpack.c.l.b16 %v176
    %v213 = vunpack.c.l.b16 %v177
    %v214 = vunpack.c.l.b16 %v178
    %v215 = vunpack.c.l.b16 %v179
    %v216 = vunpack.c.l.b16 %v180
    %v217 = vunpack.c.l.b16 %v181
    %v218 = vunpack.c.l.b16 %v182
    %v219 = vunpack.c.l.b16 %v183
    %v220 = vunpack.c.l.b16 %v184
    %v221 = vunpack.c.l.b16 %v185
    %v222 = vunpack.c.l.b16 %v186
    %v223 = vunpack.c.l.b16 %v187
    %v224 = vpack.c.b16 %v209, %v208
    %v225 = vpack.c.b16 %v211, %v210
    %v226 = vpack.c.b16 %v213, %v212
    %v227 = vpack.c.b16 %v215, %v214
    %v228 = vpack.c.b16 %v217, %v216
    %v229 = vpack.c.b16 %v219, %v218
    %v230 = vpack.c.b16 %v221, %v220
    %v231 = vpack.c.b16 %v223, %v222
    %240 = vmatpush.bf16.msra.mxu0 %v231
    %241 = vmatpush.bf16.msra.mxu0 %v230
    %242 = vmatpush.bf16.msra.mxu0 %v229
    %243 = vmatpush.bf16.msra.mxu0 %v228
    %244 = vmatpush.bf16.msra.mxu0 %v227
    %245 = vmatpush.bf16.msra.mxu0 %v226
    %246 = vmatpush.bf16.msra.mxu0 %v225
    %247 = vmatpush.bf16.msra.mxu0 %v224
    %248 = vmatmul.bf16.gmra.mxu0 %v171
    %v249 = vpop.f32.mrf.mxu0
    %v250 = vadd.f32 %v190, %v249
    %v251 = vpop.f32.mrf.mxu0
    %v252 = vadd.f32 %v190, %v251
    %253 = vdwg.mxu0
    %v254 = vadd.f32 %v250, %v68
    %v255 = vadd.f32 %v252, %v69
    %256 = vst [vmem:[#allocation8] sm:$0xff] %v254
    %257 = vst [vmem:[#allocation8 + $0x8] sm:$0xff] %v255
    // Predicated region
    $region34: #{tpu_custom_call.1} parent=1 // pred_check
      _
    $region35: #{tpu_custom_call.1} parent=1 // pred_check_branch
      %259 = sbr.rel (0) target = $region37
    $region36: #{tpu_custom_call.1} parent=1 // pred_region
      %261 = vsyncadd [#allocation4], 0
      %s262 = sshll.u32 [#allocation8], 4
      %s263 = int_to_ptr.vmem [resolvable:$true] %s262
      %s264 = sshll.u32 %s5, 4
      %s265 = int_to_ptr.hbm [resolvable:$true] %s264
      %270 = dma.vmem_to_hbm [thread:$0]  %s263, 256, %s265, [#allocation4], 128, 128, 8
    $region37: #{tpu_custom_call.1} parent=1 // pred_fallthru
      _
    // Predicated region
    $region38: #{tpu_custom_call.1} parent=1 // pred_check
      _
    $region39: #{tpu_custom_call.1} parent=1 // pred_check_branch
      %272 = sbr.rel (0) target = $region41
    $region40: #{tpu_custom_call.1} parent=1 // pred_region
      %274 = dma.done [#allocation4], 256
    $region41: #{tpu_custom_call.1} parent=1 // pred_fallthru
      _
    %275 = vsyncpa [#allocation3], 1
    %276 = vsyncpa [#allocation6], 1
    %277 = vsyncpa [#allocation4], 1

</llo_original>
